<compile_context>
chip_gen: v6e
topology: v6e:2x2x1
jax: 0.10.0
libtpu: 0.0.40
codegen_flags: <defaults>
</compile_context>

<pallas_src>
import jax
import jax.numpy as jnp
from jax.experimental import pallas as pl
from jax.experimental.pallas import tpu as pltpu


def _round_up(x, m):
    return (x + m - 1) // m * m


# ---------------------------------------------------------------------------
# Kernel body
# ---------------------------------------------------------------------------
def _ffn_kernel(x_ref, w1_ref, b1_ref, w2_ref, b2_ref, o_ref, acc_ref):
    # x_ref:  (tm, hid_p)          w1_ref: (hid_p, tk)   b1_ref: (1, tk)
    # w2_ref: (tk, hid_p)          b2_ref: (1, hid_p)
    # o_ref:  (tm, hid_p)          acc_ref: (tm, hid_p) f32 scratch
    k = pl.program_id(1)

    @pl.when(k == 0)
    def _():
        acc_ref[...] = jnp.zeros_like(acc_ref)

    # fc1 chunk (native-dtype operands on the MXU, f32 accumulation) + bias + ReLU.
    h = jnp.dot(x_ref[...], w1_ref[...], preferred_element_type=jnp.float32)
    h = jnp.maximum(h + b1_ref[...].astype(jnp.float32), 0.0)

    # dropout: eval-mode identity.
    # TODO(synk): training dropout via pltpu.prng_seed + stateful_bernoulli mask.

    # fc2 partial sum over the pf chunks (accumulate in f32 VMEM scratch).
    acc_ref[...] += jnp.dot(h.astype(w2_ref.dtype), w2_ref[...],
                            preferred_element_type=jnp.float32)

    # Finalize: fold the b2 bias add into the last reduction step only.
    @pl.when(k == pl.num_programs(1) - 1)
    def _():
        o_ref[...] = (acc_ref[...] + b2_ref[...].astype(jnp.float32)).astype(o_ref.dtype)


# ---------------------------------------------------------------------------
# Generation-aware configuration
# ---------------------------------------------------------------------------
def _vmem_capacity_bytes(device_kind):
    try:
        info = pltpu.get_tpu_info()
        cap = getattr(info, "vmem_capacity_bytes", None)
        if cap:
            return int(cap)
    except Exception:
        pass
    if "v7" in device_kind or "7x" in device_kind:
        return 64 * 1024 * 1024           # per-TC on v7x
    return 128 * 1024 * 1024              # v5e / v6e


def _footprint_bytes(tm, tk, hid_p, itemsize):
    # double-buffered in/out tiles + f32 accumulator
    dbuf = (tm * hid_p            # x tile
            + hid_p * tk + tk     # w1 tile + b1 tile
            + tk * hid_p + hid_p  # w2 tile + b2 tile
            + tm * hid_p)         # out tile
    return 2 * dbuf * itemsize + tm * hid_p * 4


def _ffn_config(hid, pf, dtype):
    itemsize = jnp.dtype(dtype).itemsize
    sub = max(8, 32 // itemsize)          # sublane multiple: f32->8, bf16->16, int8->32

    kind = jax.devices()[0].device_kind.lower()
    is_v7 = ("v7" in kind) or ("7x" in kind)
    is_v6 = "v6" in kind

    cap = _vmem_capacity_bytes(kind)
    if is_v7:
        cap = min(cap, 64 * 1024 * 1024)                      # per-TC VMEM
        vmem_limit = min(int(0.85 * cap), 56 * 1024 * 1024)   # never ask for all of it
        tm_def, tk_def, hid_align = 512, 256, 256             # weight reuse > k-width
    elif is_v6:
        vmem_limit = int(0.85 * cap)                          # ~109 MiB of 128 MiB
        tm_def, tk_def, hid_align = 512, 1024, 256
    else:  # v5e / older / unknown: roofline already met at modest tm
        vmem_limit = int(0.85 * cap)
        tm_def, tk_def, hid_align = 256, 512, 128
        # NOTE: on v5e, extra VMEM is better spent on deeper weight pipelining
        # (pl.Buffered(3) on w1/w2) than on bigger tiles; kept default-buffered
        # here for portability.

    tm_def = _round_up(tm_def, sub)
    hid_p = _round_up(hid, hid_align)
    tk = min(tk_def, _round_up(pf, 128))

    # Fit the worst-case (tm = tm_def) footprint within the VMEM budget:
    # shrink the k-chunk first (keeps weight reuse), then the M tile.
    while _footprint_bytes(tm_def, tk, hid_p, itemsize) > vmem_limit and tk > 128:
        tk = max(128, (tk // 2) // 128 * 128)
    while _footprint_bytes(tm_def, tk, hid_p, itemsize) > vmem_limit and tm_def > sub:
        tm_def = max(sub, _round_up(tm_def // 2, sub))

    pf_p = _round_up(pf, tk)
    return dict(tm_def=tm_def, tk=tk, hid_p=hid_p, pf_p=pf_p, sub=sub,
                vmem_limit=int(vmem_limit), itemsize=itemsize)


def _choose_tm(M, tm_max, sub):
    """Pick the largest M tile <= tm_max keeping M-padding <= ~10%."""
    if M <= tm_max:
        return max(sub, _round_up(M, sub))
    best_tm = tm_max
    best_pad = _round_up(M, tm_max) - M
    tm = tm_max
    while tm > sub:
        pad = _round_up(M, tm) - M
        if pad * 10 <= M:
            return tm
        if pad < best_pad:
            best_tm, best_pad = tm, pad
        tm = max(sub, _round_up(tm // 2, sub))
    if _round_up(M, sub) - M < best_pad:
        best_tm = sub
    return best_tm


# ---------------------------------------------------------------------------
# Wrappers
# ---------------------------------------------------------------------------
def prepare_ffn_params(w1, b1, w2, b2, compute_dtype=None):
    """Pad weights/biases once (hoisted out of the per-call path)."""
    hid, pf = w1.shape
    assert w2.shape == (pf, hid)
    dtype = compute_dtype if compute_dtype is not None else w1.dtype
    cfg = _ffn_config(hid, pf, dtype)
    hid_p, pf_p = cfg["hid_p"], cfg["pf_p"]

    w1p = w1 if (hid_p == hid and pf_p == pf) else jnp.pad(
        w1, ((0, hid_p - hid), (0, pf_p - pf)))
    b1p = (b1 if pf_p == pf else jnp.pad(b1, (0, pf_p - pf))).reshape(1, pf_p)
    w2p = w2 if (pf_p == pf and hid_p == hid) else jnp.pad(
        w2, ((0, pf_p - pf), (0, hid_p - hid)))
    b2p = (b2 if hid_p == hid else jnp.pad(b2, (0, hid_p - hid))).reshape(1, hid_p)

    return dict(w1=w1p, b1=b1p, w2=w2p, b2=b2p, hid=hid, pf=pf, cfg=cfg)


def feed_forward_prepared(x, params):
    """x: [batch, seq, hid]; params from prepare_ffn_params()."""
    batch, seq, hid = x.shape
    assert hid == params["hid"]
    cfg = params["cfg"]
    hid_p, pf_p, tk, sub = cfg["hid_p"], cfg["pf_p"], cfg["tk"], cfg["sub"]

    M = batch * seq
    tm = _choose_tm(M, cfg["tm_def"], sub)
    M_p = _round_up(M, tm)
    num_m = M_p // tm

    x2d = x.reshape(M, hid)
    pad_x = (M_p != M) or (hid_p != hid)
    if pad_x:
        x2d = jnp.pad(x2d, ((0, M_p - M), (0, hid_p - hid)))

    itemsize = cfg["itemsize"]
    # Weights are re-streamed once per M tile; x/out move once.
    cost = pl.CostEstimate(
        flops=4 * M_p * hid_p * pf_p,
        transcendentals=0,
        bytes_accessed=int((2 * M_p * hid_p
                            + num_m * (2 * hid_p * pf_p + pf_p + hid_p)) * itemsize),
    )

    out = pl.pallas_call(
        _ffn_kernel,
        out_shape=jax.ShapeDtypeStruct((M_p, hid_p), x.dtype),
        grid_spec=pltpu.PrefetchScalarGridSpec(
            num_scalar_prefetch=0,
            grid=(num_m, pf_p // tk),
            in_specs=[
                pl.BlockSpec((tm, hid_p), lambda i, k: (i, 0)),   # x tile (resident over k)
                pl.BlockSpec((hid_p, tk), lambda i, k: (0, k)),   # w1 pf-chunk
                pl.BlockSpec((1, tk), lambda i, k: (0, k)),       # b1 pf-chunk
                pl.BlockSpec((tk, hid_p), lambda i, k: (k, 0)),   # w2 pf-chunk
                pl.BlockSpec((1, hid_p), lambda i, k: (0, 0)),    # b2
            ],
            out_specs=pl.BlockSpec((tm, hid_p), lambda i, k: (i, 0)),
            scratch_shapes=[pltpu.VMEM((tm, hid_p), jnp.float32)],
        ),
        compiler_params=pltpu.CompilerParams(
            dimension_semantics=("parallel", "arbitrary"),
            vmem_limit_bytes=cfg["vmem_limit"],
        ),
        cost_estimate=cost,
    )(x2d, params["w1"], params["b1"], params["w2"], params["b2"])

    if pad_x:
        out = out[:M, :hid]
    return out.reshape(batch, seq, hid)


def feed_forward(x, w1, b1, w2, b2):
    """Convenience one-shot wrapper (pads weights per call; prefer prepare_ffn_params)."""
    return feed_forward_prepared(x, prepare_ffn_params(w1, b1, w2, b2, x.dtype))


def reference(x, w1, b1, w2, b2):
    """Pure-JAX reference mimicking the kernel numerics (f32 accum, native-dtype h)."""
    f32 = jnp.float32
    h = jnp.maximum(
        jnp.einsum("bsh,hp->bsp", x.astype(f32), w1.astype(f32)) + b1.astype(f32), 0.0)
    h = h.astype(w2.dtype).astype(f32)   # kernel casts h to the weight dtype before fc2
    y = jnp.einsum("bsp,ph->bsh", h, w2.astype(f32)) + b2.astype(f32)
    return y.astype(x.dtype)


if __name__ == "__main__":
    batch, seq, hid_dim, pf_dim = 2, 8, 32, 64

    key = jax.random.PRNGKey(0)
    kx, k1, k2, k3, k4 = jax.random.split(key, 5)

    dtype = jnp.bfloat16   # bf16 operands -> full-rate MXU; accumulation stays f32
    x = jax.random.normal(kx, (batch, seq, hid_dim), dtype=jnp.float32).astype(dtype)
    w1 = (jax.random.normal(k1, (hid_dim, pf_dim), dtype=jnp.float32) * 0.1).astype(dtype)
    b1 = (jax.random.normal(k2, (pf_dim,), dtype=jnp.float32) * 0.1).astype(dtype)
    w2 = (jax.random.normal(k3, (pf_dim, hid_dim), dtype=jnp.float32) * 0.1).astype(dtype)
    b2 = (jax.random.normal(k4, (hid_dim,), dtype=jnp.float32) * 0.1).astype(dtype)

    # Pad the weights once (hoisted out of the per-call path), then run the kernel.
    params = prepare_ffn_params(w1, b1, w2, b2, compute_dtype=dtype)
    out = feed_forward_prepared(x, params)
    out = jax.block_until_ready(out)

    ref = reference(x, w1, b1, w2, b2)
    assert out.shape == (batch, seq, hid_dim)
    err = float(jnp.max(jnp.abs(out.astype(jnp.float32) - ref.astype(jnp.float32))))
    assert err < 2e-2, f"mismatch vs reference: max abs err {err}"

    print("KERNEL_OK")
</pallas_src>

<mosaic_0001>
module attributes {stable_mosaic.version = 11 : i64} {
  func.func @_ffn_kernel(%arg0: i32, %arg1: i32, %arg2: memref<16x128xbf16, #tpu.memory_space<vmem>>, %arg3: memref<128x128xbf16, #tpu.memory_space<vmem>>, %arg4: memref<1x128xbf16, #tpu.memory_space<vmem>>, %arg5: memref<128x128xbf16, #tpu.memory_space<vmem>>, %arg6: memref<1x128xbf16, #tpu.memory_space<vmem>>, %arg7: memref<16x128xbf16, #tpu.memory_space<vmem>>, %arg8: memref<16x128xf32, #tpu.memory_space<vmem>>) attributes {dimension_semantics = [#tpu.dimension_semantics<parallel>, #tpu.dimension_semantics<arbitrary>], iteration_bounds = array<i64: 1, 1>, scalar_prefetch = 0 : i64, scratch_operands = 1 : i64, tpu.core_type = #tpu.core_type<tc>, window_params = [{transform_indices = @transform_0, window_bounds = array<i64: 16, 128>}, {transform_indices = @transform_1, window_bounds = array<i64: 128, 128>}, {transform_indices = @transform_2, window_bounds = array<i64: 1, 128>}, {transform_indices = @transform_3, window_bounds = array<i64: 128, 128>}, {pipeline_mode = #tpu.pipeline_mode<synchronous>, transform_indices = @transform_4, window_bounds = array<i64: 1, 128>}, {transform_indices = @transform_5, window_bounds = array<i64: 16, 128>}]} {
    %c0_i32 = arith.constant 0 : i32
    %0 = arith.cmpi eq, %arg1, %c0_i32 : i32
    %1 = arith.extui %0 : i1 to i32
    %c0_i32_0 = arith.constant 0 : i32
    %2 = arith.cmpi ne, %1, %c0_i32_0 : i32
    scf.if %2 {
      %cst_16 = arith.constant 0.000000e+00 : f32
      %21 = vector.broadcast %cst_16 : f32 to vector<16x128xf32>
      %c0_17 = arith.constant 0 : index
      %c0_18 = arith.constant 0 : index
      %22 = vector.load %arg8[%c0_17, %c0_18] : memref<16x128xf32, #tpu.memory_space<vmem>>, vector<16x128xf32>
      tpu.vector_store %arg8[%c0_17, %c0_18], %21 {strides = array<i32>} : memref<16x128xf32, #tpu.memory_space<vmem>>, vector<16x128xf32>,
    } else {
    }
    %c0 = arith.constant 0 : index
    %c0_1 = arith.constant 0 : index
    %3 = vector.load %arg2[%c0, %c0_1] : memref<16x128xbf16, #tpu.memory_space<vmem>>, vector<16x128xbf16>
    %c0_2 = arith.constant 0 : index
    %c0_3 = arith.constant 0 : index
    %4 = vector.load %arg3[%c0_2, %c0_3] : memref<128x128xbf16, #tpu.memory_space<vmem>>, vector<128x128xbf16>
    %cst = arith.constant dense<0.000000e+00> : vector<16x128xf32>
    %5 = tpu.matmul %3, %4, %cst {dimension_numbers = #tpu.dot_dimension_numbers<[1], [0], [0], [1], [0, 0, 1, 1], [], []>} : vector<16x128xbf16>, vector<128x128xbf16>, vector<16x128xf32> -> vector<16x128xf32>
    %c0_4 = arith.constant 0 : index
    %c0_5 = arith.constant 0 : index
    %6 = vector.load %arg4[%c0_4, %c0_5] : memref<1x128xbf16, #tpu.memory_space<vmem>>, vector<1x128xbf16>
    %7 = arith.extf %6 : vector<1x128xbf16> to vector<1x128xf32>
    %8 = vector.broadcast %7 : vector<1x128xf32> to vector<16x128xf32>
    %9 = arith.addf %5, %8 : vector<16x128xf32>
    %cst_6 = arith.constant 0.000000e+00 : f32
    %10 = vector.broadcast %cst_6 : f32 to vector<16x128xf32>
    %11 = arith.maximumf %9, %10 : vector<16x128xf32>
    %c0_7 = arith.constant 0 : index
    %c0_8 = arith.constant 0 : index
    %12 = vector.load %arg8[%c0_7, %c0_8] : memref<16x128xf32, #tpu.memory_space<vmem>>, vector<16x128xf32>
    %13 = arith.truncf %11 : vector<16x128xf32> to vector<16x128xbf16>
    %c0_9 = arith.constant 0 : index
    %c0_10 = arith.constant 0 : index
    %14 = vector.load %arg5[%c0_9, %c0_10] : memref<128x128xbf16, #tpu.memory_space<vmem>>, vector<128x128xbf16>
    %cst_11 = arith.constant dense<0.000000e+00> : vector<16x128xf32>
    %15 = tpu.matmul %13, %14, %cst_11 {dimension_numbers = #tpu.dot_dimension_numbers<[1], [0], [0], [1], [0, 0, 1, 1], [], []>} : vector<16x128xbf16>, vector<128x128xbf16>, vector<16x128xf32> -> vector<16x128xf32>
    %16 = arith.addf %12, %15 : vector<16x128xf32>
    %c0_12 = arith.constant 0 : index
    %c0_13 = arith.constant 0 : index
    %17 = vector.load %arg8[%c0_12, %c0_13] : memref<16x128xf32, #tpu.memory_space<vmem>>, vector<16x128xf32>
    tpu.vector_store %arg8[%c0_12, %c0_13], %16 {strides = array<i32>} : memref<16x128xf32, #tpu.memory_space<vmem>>, vector<16x128xf32>,
    %c0_i32_14 = arith.constant 0 : i32
    %18 = arith.cmpi eq, %arg1, %c0_i32_14 : i32
    %19 = arith.extui %18 : i1 to i32
    %c0_i32_15 = arith.constant 0 : i32
    %20 = arith.cmpi ne, %19, %c0_i32_15 : i32
    scf.if %20 {
      %c0_16 = arith.constant 0 : index
      %c0_17 = arith.constant 0 : index
      %21 = vector.load %arg8[%c0_16, %c0_17] : memref<16x128xf32, #tpu.memory_space<vmem>>, vector<16x128xf32>
      %c0_18 = arith.constant 0 : index
      %c0_19 = arith.constant 0 : index
      %22 = vector.load %arg6[%c0_18, %c0_19] : memref<1x128xbf16, #tpu.memory_space<vmem>>, vector<1x128xbf16>
      %23 = arith.extf %22 : vector<1x128xbf16> to vector<1x128xf32>
      %24 = vector.broadcast %23 : vector<1x128xf32> to vector<16x128xf32>
      %25 = arith.addf %21, %24 : vector<16x128xf32>
      %26 = arith.truncf %25 : vector<16x128xf32> to vector<16x128xbf16>
      %c0_20 = arith.constant 0 : index
      %c0_21 = arith.constant 0 : index
      %27 = vector.load %arg7[%c0_20, %c0_21] : memref<16x128xbf16, #tpu.memory_space<vmem>>, vector<16x128xbf16>
      tpu.vector_store %arg7[%c0_20, %c0_21], %26 {strides = array<i32>} : memref<16x128xbf16, #tpu.memory_space<vmem>>, vector<16x128xbf16>,
    } else {
    }
    return
  }
  func.func @transform_0(%arg0: i32, %arg1: i32) -> (i32, i32) {
    %c0_i32 = arith.constant 0 : i32
    %c0_i32_0 = arith.constant 0 : i32
    return %arg0, %c0_i32 : i32, i32
  }
  func.func @transform_1(%arg0: i32, %arg1: i32) -> (i32, i32) {
    %c0_i32 = arith.constant 0 : i32
    %c0_i32_0 = arith.constant 0 : i32
    return %c0_i32, %arg1 : i32, i32
  }
  func.func @transform_2(%arg0: i32, %arg1: i32) -> (i32, i32) {
    %c0_i32 = arith.constant 0 : i32
    %c0_i32_0 = arith.constant 0 : i32
    return %c0_i32, %arg1 : i32, i32
  }
  func.func @transform_3(%arg0: i32, %arg1: i32) -> (i32, i32) {
    %c0_i32 = arith.constant 0 : i32
    %c0_i32_0 = arith.constant 0 : i32
    return %arg1, %c0_i32 : i32, i32
  }
  func.func @transform_4(%arg0: i32, %arg1: i32) -> (i32, i32) {
    %c0_i32 = arith.constant 0 : i32
    %c0_i32_0 = arith.constant 0 : i32
    %c0_i32_1 = arith.constant 0 : i32
    return %c0_i32, %c0_i32_0 : i32, i32
  }
  func.func @transform_5(%arg0: i32, %arg1: i32) -> (i32, i32) {
    %c0_i32 = arith.constant 0 : i32
    %c0_i32_0 = arith.constant 0 : i32
    return %arg0, %c0_i32 : i32, i32
  }
}

</mosaic_0001>

<llo_original>
// kernel: tpu_custom_call.1
$region0: #{tpu_custom_call.1}
  #allocation0 [shape = 'u32[]', space=smem, size = 0x4, offset = 0x4, fixed_abs, tag = 'smem constant byte address 0x4 - core index']
  #allocation1 [shape = 'u32[144,128]{1,0:T(1,128)}', space=vmem, size = 0x12000, scoped, tag = 'internal scratch']
  #allocation2 [shape = 'f32[16,128]{1,0:T(8,128)}', space=vmem, size = 0x2000, scoped, tag = 'scratch operand']
  %s0 = inlined_call_operand.hbm [shape: bf16[16,128], index: 0, kind: input, shape index: {}]
  %s1 = inlined_call_operand.hbm [shape: bf16[128,128], index: 1, kind: input, shape index: {}]
  %s2 = inlined_call_operand.vmem [shape: bf16[1,128], index: 2, kind: input, shape index: {}]
  %s3 = inlined_call_operand.hbm [shape: bf16[128,128], index: 3, kind: input, shape index: {}]
  %s4 = inlined_call_operand.vmem [shape: bf16[1,128], index: 4, kind: input, shape index: {}]
  %s5 = inlined_call_operand.hbm [shape: bf16[16,128], index: 5, kind: output, shape index: {}]
  %s6 = sld [smem:[#allocation0]]
  $region50: #{tpu_custom_call.1} parent=0
    _
  %s8 = ssub.s32 1, %s6
  %s9 = scalar_select 0, %s8, %s6
  $region1: #{tpu_custom_call.1} parent=0
    #allocation3 [shape = 'u8[4096]{0}', space=vmem, size = 0x1000, scoped, tag = 'input window, operand 0, single buffered']
    #allocation4 [shape = 's32[1]{0}', space=sflag, size = 0x4, scoped, tag = 'scoped memory for tpu_custom_call.1']
    #allocation5 [shape = 's32[1]{0}', space=sflag, size = 0x4, scoped, tag = 'scoped memory for tpu_custom_call.1']
    #allocation6 [shape = 'u8[32768]{0}', space=vmem, size = 0x8000, scoped, tag = 'input window, operand 1, single buffered']
    #allocation7 [shape = 's32[1]{0}', space=sflag, size = 0x4, scoped, tag = 'scoped memory for tpu_custom_call.1']
    #allocation8 [shape = 'u8[32768]{0}', space=vmem, size = 0x8000, scoped, tag = 'input window, operand 3, single buffered']
    #allocation9 [shape = 'u8[4096]{0}', space=vmem, size = 0x1000, scoped, tag = 'output window, operand 0, single buffered']
    %10 = vsyncpa [#allocation4], 0
    %11 = vsyncpa [#allocation7], 0
    %12 = vsyncpa [#allocation5], 0
    // Predicated region
    $region2: #{tpu_custom_call.1} parent=1 // pred_check
      _
    $region3: #{tpu_custom_call.1} parent=1 // pred_check_branch
      %14 = sbr.rel (0) target = $region5
    $region4: #{tpu_custom_call.1} parent=1 // pred_region
      %s16 = ssub.s32 128, 128
      %17 = vsyncadd [#allocation4], %s16
      %s18 = sshll.u32 [#allocation3], 4
      %s19 = int_to_ptr.vmem [resolvable:$true] %s18
      %24 = dma.hbm_to_vmem [thread:$0]  %s0, 128, %s19, [#allocation4], 64, 64, 4
    $region5: #{tpu_custom_call.1} parent=1 // pred_fallthru
      _
    // Predicated region
    $region6: #{tpu_custom_call.1} parent=1 // pred_check
      _
    $region7: #{tpu_custom_call.1} parent=1 // pred_check_branch
      %26 = sbr.rel (0) target = $region9
    $region8: #{tpu_custom_call.1} parent=1 // pred_region
      %s28 = ssub.s32 1024, 1024
      %29 = vsyncadd [#allocation7], %s28
      %s30 = sshll.u32 [#allocation6], 4
      %s31 = int_to_ptr.vmem [resolvable:$true] %s30
      %36 = dma.hbm_to_vmem [thread:$0]  %s1, 1024, %s31, [#allocation7], 64, 64, 4
    $region9: #{tpu_custom_call.1} parent=1 // pred_fallthru
      _
    // Predicated region
    $region10: #{tpu_custom_call.1} parent=1 // pred_check
      _
    $region11: #{tpu_custom_call.1} parent=1 // pred_check_branch
      %38 = sbr.rel (0) target = $region13
    $region12: #{tpu_custom_call.1} parent=1 // pred_region
      _
    $region13: #{tpu_custom_call.1} parent=1 // pred_fallthru
      _
    // Predicated region
    $region14: #{tpu_custom_call.1} parent=1 // pred_check
      _
    $region15: #{tpu_custom_call.1} parent=1 // pred_check_branch
      %40 = sbr.rel (0) target = $region17
    $region16: #{tpu_custom_call.1} parent=1 // pred_region
      %s42 = ssub.s32 1024, 1024
      %43 = vsyncadd [#allocation7], %s42
      %s44 = sshll.u32 [#allocation8], 4
      %s45 = int_to_ptr.vmem [resolvable:$true] %s44
      %50 = dma.hbm_to_vmem [thread:$0]  %s3, 1024, %s45, [#allocation7], 64, 64, 4
    $region17: #{tpu_custom_call.1} parent=1 // pred_fallthru
      _
    // Predicated region
    $region18: #{tpu_custom_call.1} parent=1 // pred_check
      _
    $region19: #{tpu_custom_call.1} parent=1 // pred_check_branch
      %52 = sbr.rel (0) target = $region21
    $region20: #{tpu_custom_call.1} parent=1 // pred_region
      _
    $region21: #{tpu_custom_call.1} parent=1 // pred_fallthru
      _
    // Predicated region
    $region22: #{tpu_custom_call.1} parent=1 // pred_check
      _
    $region23: #{tpu_custom_call.1} parent=1 // pred_check_branch
      %54 = sbr.rel (0) target = $region25
    $region24: #{tpu_custom_call.1} parent=1 // pred_region
      %55 = dma.done [#allocation4], 128
    $region25: #{tpu_custom_call.1} parent=1 // pred_fallthru
      _
    // Predicated region
    $region26: #{tpu_custom_call.1} parent=1 // pred_check
      _
    $region27: #{tpu_custom_call.1} parent=1 // pred_check_branch
      %57 = sbr.rel (0) target = $region29
    $region28: #{tpu_custom_call.1} parent=1 // pred_region
      %58 = dma.done [#allocation7], 1024
    $region29: #{tpu_custom_call.1} parent=1 // pred_fallthru
      _
    // Predicated region
    $region30: #{tpu_custom_call.1} parent=1 // pred_check
      _
    $region31: #{tpu_custom_call.1} parent=1 // pred_check_branch
      %60 = sbr.rel (0) target = $region33
    $region32: #{tpu_custom_call.1} parent=1 // pred_region
      %61 = dma.done [#allocation7], 1024
    $region33: #{tpu_custom_call.1} parent=1 // pred_fallthru
      _
    %p63 = scmp.eq.s32.totalorder 0, 0
    // Predicated region
    $region34: #{tpu_custom_call.1} parent=1 // pred_check
      %p64 = pneg %p63
    $region35: #{tpu_custom_call.1} parent=1 // pred_check_branch
      %66 = sbr.rel (%p64) target = $region37
    $region36: #{tpu_custom_call.1} parent=1 // pred_region
      %67 = vst [vmem:[#allocation2] sm:$0xff] 0.0
      %68 = vst [vmem:[#allocation2 + $0x8] sm:$0xff] 0.0
    $region37: #{tpu_custom_call.1} parent=1 // pred_fallthru
      _
    %v69 = vld [vmem:[#allocation3] sm:$0xf]
    %v70 = vld [vmem:[#allocation3 + $0x4] sm:$0xf]
    %v71 = vld [vmem:[#allocation6] sm:$0xf]
    %v72 = vld [vmem:[#allocation6 + $0x4] sm:$0xf]
    %v73 = vld [vmem:[#allocation6 + $0x8] sm:$0xf]
    %v74 = vld [vmem:[#allocation6 + $0xc] sm:$0xf]
    %v75 = vld [vmem:[#allocation6 + $0x10] sm:$0xf]
    %v76 = vld [vmem:[#allocation6 + $0x14] sm:$0xf]
    %v77 = vld [vmem:[#allocation6 + $0x18] sm:$0xf]
    %v78 = vld [vmem:[#allocation6 + $0x1c] sm:$0xf]
    %v79 = vld [vmem:[#allocation6 + $0x20] sm:$0xf]
    %v80 = vld [vmem:[#allocation6 + $0x24] sm:$0xf]
    %v81 = vld [vmem:[#allocation6 + $0x28] sm:$0xf]
    %v82 = vld [vmem:[#allocation6 + $0x2c] sm:$0xf]
    %v83 = vld [vmem:[#allocation6 + $0x30] sm:$0xf]
    %v84 = vld [vmem:[#allocation6 + $0x34] sm:$0xf]
    %v85 = vld [vmem:[#allocation6 + $0x38] sm:$0xf]
    %v86 = vld [vmem:[#allocation6 + $0x3c] sm:$0xf]
    %v87 = vld [vmem:[%s2] sm:$0x1]
    %v88 = vunpack.c.l.bf16 %v87
    %v89 = vlaneseq
    %v90 = vshrl.u32 %v89, 7
    %v91 = vsub.s32 0, %v90
    %v92 = vrot.slane %v88, %v91
    %v95 = vunpack.c.l.b16 %v69
    %v96 = vunpack.c.l.b16 %v70
    %v97 = vpack.c.b16 %v96, %v95
    %v115 = vunpack.c.l.b16 %v71
    %v116 = vunpack.c.l.b16 %v72
    %v117 = vunpack.c.l.b16 %v73
    %v118 = vunpack.c.l.b16 %v74
    %v119 = vunpack.c.l.b16 %v75
    %v120 = vunpack.c.l.b16 %v76
    %v121 = vunpack.c.l.b16 %v77
    %v122 = vunpack.c.l.b16 %v78
    %v123 = vunpack.c.l.b16 %v79
    %v124 = vunpack.c.l.b16 %v80
    %v125 = vunpack.c.l.b16 %v81
    %v126 = vunpack.c.l.b16 %v82
    %v127 = vunpack.c.l.b16 %v83
    %v128 = vunpack.c.l.b16 %v84
    %v129 = vunpack.c.l.b16 %v85
    %v130 = vunpack.c.l.b16 %v86
    %v131 = vpack.c.b16 %v116, %v115
    %v132 = vpack.c.b16 %v118, %v117
    %v133 = vpack.c.b16 %v120, %v119
    %v134 = vpack.c.b16 %v122, %v121
    %v135 = vpack.c.b16 %v124, %v123
    %v136 = vpack.c.b16 %v126, %v125
    %v137 = vpack.c.b16 %v128, %v127
    %v138 = vpack.c.b16 %v130, %v129
    %147 = vmatprep.subr.bf16.mxu0 0
    %148 = vmatpush1.bf16.msra.mxu0 %v138
    %149 = vmatprep.subr.bf16.mxu0 0
    %150 = vmatpush1.bf16.msra.mxu0 %v137
    %151 = vmatprep.subr.bf16.mxu0 0
    %152 = vmatpush1.bf16.msra.mxu0 %v136
    %153 = vmatprep.subr.bf16.mxu0 0
    %154 = vmatpush1.bf16.msra.mxu0 %v135
    %155 = vmatprep.subr.bf16.mxu0 0
    %156 = vmatpush1.bf16.msra.mxu0 %v134
    %157 = vmatprep.subr.bf16.mxu0 0
    %158 = vmatpush1.bf16.msra.mxu0 %v133
    %159 = vmatprep.subr.bf16.mxu0 0
    %160 = vmatpush1.bf16.msra.mxu0 %v132
    %161 = vmatprep.subr.bf16.mxu0 0
    %162 = vmatpush1.bf16.msra.mxu0 %v131
    %163 = vmatprep.subr.bf16.mxu0 0
    %164 = vmatpush2.bf16.msra.mxu0 0
    %165 = vmatprep.subr.bf16.mxu0 0
    %166 = vmatpush2.bf16.msra.mxu0 0
    %167 = vmatprep.subr.bf16.mxu0 0
    %168 = vmatpush2.bf16.msra.mxu0 0
    %169 = vmatprep.subr.bf16.mxu0 0
    %170 = vmatpush2.bf16.msra.mxu0 0
    %171 = vmatprep.subr.bf16.mxu0 0
    %172 = vmatpush2.bf16.msra.mxu0 0
    %173 = vmatprep.subr.bf16.mxu0 0
    %174 = vmatpush2.bf16.msra.mxu0 0
    %175 = vmatprep.subr.bf16.mxu0 0
    %176 = vmatpush2.bf16.msra.mxu0 0
    %177 = vmatprep.subr.bf16.mxu0 0
    %178 = vmatpush2.bf16.msra.mxu0 0
    %179 = vmatprep.mubr.bf16.mxu0 0
    %180 = vmatmul.mubr.bf16.gmra.mxu0 %v97
    %v181 = vpop.f32.mrf.mxu0
    %v182 = vadd.f32 %v92, %v181
    %v183 = vpop.f32.mrf.mxu0
    %v184 = vpop.f32.mrf.mxu0
    %v185 = vadd.f32 %v92, %v184
    %v186 = vpop.f32.mrf.mxu0
    %187 = vdwg.mxu0
    %v188 = vmax.f32 %v182, 0.0
    %v189 = vmax.f32 %v185, 0.0
    %v190 = vld [vmem:[#allocation2] sm:$0xff]
    %v191 = vld [vmem:[#allocation2 + $0x8] sm:$0xff]
    %v192 = vpack.c.bf16 %v189, %v188
    %v193 = vld [vmem:[#allocation8] sm:$0xf]
    %v194 = vld [vmem:[#allocation8 + $0x4] sm:$0xf]
    %v195 = vld [vmem:[#allocation8 + $0x8] sm:$0xf]
    %v196 = vld [vmem:[#allocation8 + $0xc] sm:$0xf]
    %v197 = vld [vmem:[#allocation8 + $0x10] sm:$0xf]
    %v198 = vld [vmem:[#allocation8 + $0x14] sm:$0xf]
    %v199 = vld [vmem:[#allocation8 + $0x18] sm:$0xf]
    %v200 = vld [vmem:[#allocation8 + $0x1c] sm:$0xf]
    %v201 = vld [vmem:[#allocation8 + $0x20] sm:$0xf]
    %v202 = vld [vmem:[#allocation8 + $0x24] sm:$0xf]
    %v203 = vld [vmem:[#allocation8 + $0x28] sm:$0xf]
    %v204 = vld [vmem:[#allocation8 + $0x2c] sm:$0xf]
    %v205 = vld [vmem:[#allocation8 + $0x30] sm:$0xf]
    %v206 = vld [vmem:[#allocation8 + $0x34] sm:$0xf]
    %v207 = vld [vmem:[#allocation8 + $0x38] sm:$0xf]
    %v208 = vld [vmem:[#allocation8 + $0x3c] sm:$0xf]
    %v225 = vunpack.c.l.b16 %v193
    %v226 = vunpack.c.l.b16 %v194
    %v227 = vunpack.c.l.b16 %v195
    %v228 = vunpack.c.l.b16 %v196
    %v229 = vunpack.c.l.b16 %v197
    %v230 = vunpack.c.l.b16 %v198
    %v231 = vunpack.c.l.b16 %v199
    %v232 = vunpack.c.l.b16 %v200
    %v233 = vunpack.c.l.b16 %v201
    %v234 = vunpack.c.l.b16 %v202
    %v235 = vunpack.c.l.b16 %v203
    %v236 = vunpack.c.l.b16 %v204
    %v237 = vunpack.c.l.b16 %v205
    %v238 = vunpack.c.l.b16 %v206
    %v239 = vunpack.c.l.b16 %v207
    %v240 = vunpack.c.l.b16 %v208
    %v241 = vpack.c.b16 %v226, %v225
    %v242 = vpack.c.b16 %v228, %v227
    %v243 = vpack.c.b16 %v230, %v229
    %v244 = vpack.c.b16 %v232, %v231
    %v245 = vpack.c.b16 %v234, %v233
    %v246 = vpack.c.b16 %v236, %v235
    %v247 = vpack.c.b16 %v238, %v237
    %v248 = vpack.c.b16 %v240, %v239
    %257 = vmatprep.subr.bf16.mxu0 0
    %258 = vmatpush1.bf16.msra.mxu0 %v248
    %259 = vmatprep.subr.bf16.mxu0 0
    %260 = vmatpush1.bf16.msra.mxu0 %v247
    %261 = vmatprep.subr.bf16.mxu0 0
    %262 = vmatpush1.bf16.msra.mxu0 %v246
    %263 = vmatprep.subr.bf16.mxu0 0
    %264 = vmatpush1.bf16.msra.mxu0 %v245
    %265 = vmatprep.subr.bf16.mxu0 0
    %266 = vmatpush1.bf16.msra.mxu0 %v244
    %267 = vmatprep.subr.bf16.mxu0 0
    %268 = vmatpush1.bf16.msra.mxu0 %v243
    %269 = vmatprep.subr.bf16.mxu0 0
    %270 = vmatpush1.bf16.msra.mxu0 %v242
    %271 = vmatprep.subr.bf16.mxu0 0
    %272 = vmatpush1.bf16.msra.mxu0 %v241
    %273 = vmatprep.subr.bf16.mxu0 0
    %274 = vmatpush2.bf16.msra.mxu0 0
    %275 = vmatprep.subr.bf16.mxu0 0
    %276 = vmatpush2.bf16.msra.mxu0 0
    %277 = vmatprep.subr.bf16.mxu0 0
    %278 = vmatpush2.bf16.msra.mxu0 0
    %279 = vmatprep.subr.bf16.mxu0 0
    %280 = vmatpush2.bf16.msra.mxu0 0
    %281 = vmatprep.subr.bf16.mxu0 0
    %282 = vmatpush2.bf16.msra.mxu0 0
    %283 = vmatprep.subr.bf16.mxu0 0
    %284 = vmatpush2.bf16.msra.mxu0 0
    %285 = vmatprep.subr.bf16.mxu0 0
    %286 = vmatpush2.bf16.msra.mxu0 0
    %287 = vmatprep.subr.bf16.mxu0 0
    %288 = vmatpush2.bf16.msra.mxu0 0
    %289 = vmatprep.mubr.bf16.mxu0 0
    %290 = vmatmul.mubr.bf16.gmra.mxu0 %v192
    %v291 = vpop.f32.mrf.mxu0
    %v292 = vadd.f32 0.0, %v291
    %v293 = vpop.f32.mrf.mxu0
    %v294 = vpop.f32.mrf.mxu0
    %v295 = vadd.f32 0.0, %v294
    %v296 = vpop.f32.mrf.mxu0
    %297 = vdwg.mxu0
    %v298 = vadd.f32 %v190, %v292
    %v299 = vadd.f32 %v191, %v295
    %300 = vst [vmem:[#allocation2] sm:$0xff] %v298
    %301 = vst [vmem:[#allocation2 + $0x8] sm:$0xff] %v299
    // Predicated region
    $region38: #{tpu_custom_call.1} parent=1 // pred_check
      %p302 = pneg %p63
    $region39: #{tpu_custom_call.1} parent=1 // pred_check_branch
      %304 = sbr.rel (%p302) target = $region41
    $region40: #{tpu_custom_call.1} parent=1 // pred_region
      %v305 = vld [vmem:[#allocation2] sm:$0xff]
      %v306 = vld [vmem:[#allocation2 + $0x8] sm:$0xff]
      %v307 = vld [vmem:[%s4] sm:$0x1]
      %v308 = vunpack.c.l.bf16 %v307
      %v309 = vlaneseq
      %v310 = vshrl.u32 %v309, 7
      %v311 = vsub.s32 0, %v310
      %v312 = vrot.slane %v308, %v311
      %v313 = vadd.f32 %v305, %v312
      %v314 = vadd.f32 %v306, %v312
      %v315 = vpack.c.bf16 %v314, %v313
      %v317 = vunpack.c.l.b16 %v315
      %v318 = vunpack.c.h.b16 %v315
      %v319 = vpack.c.b16 %v317, %v317
      %v320 = vpack.c.b16 %v318, %v318
      %323 = vst [vmem:[#allocation9] sm:$0xf] %v319
      %324 = vst [vmem:[#allocation9 + $0x4] sm:$0xf] %v320
    $region41: #{tpu_custom_call.1} parent=1 // pred_fallthru
      _
    // Predicated region
    $region42: #{tpu_custom_call.1} parent=1 // pred_check
      _
    $region43: #{tpu_custom_call.1} parent=1 // pred_check_branch
      %326 = sbr.rel (0) target = $region45
    $region44: #{tpu_custom_call.1} parent=1 // pred_region
      %s328 = ssub.s32 128, 128
      %329 = vsyncadd [#allocation5], %s328
      %s330 = sshll.u32 [#allocation9], 4
      %s331 = int_to_ptr.vmem [resolvable:$true] %s330
      %336 = dma.vmem_to_hbm [thread:$0]  %s331, 128, %s5, [#allocation5], 64, 64, 4
    $region45: #{tpu_custom_call.1} parent=1 // pred_fallthru
      _
    // Predicated region
    $region46: #{tpu_custom_call.1} parent=1 // pred_check
      _
    $region47: #{tpu_custom_call.1} parent=1 // pred_check_branch
      %338 = sbr.rel (0) target = $region49
    $region48: #{tpu_custom_call.1} parent=1 // pred_region
      %339 = dma.done [#allocation5], 128
    $region49: #{tpu_custom_call.1} parent=1 // pred_fallthru
      _
    %340 = vsyncpa [#allocation4], 1
    %341 = vsyncpa [#allocation7], 1
    %342 = vsyncpa [#allocation5], 1

</llo_original>
